<compile_context>
chip_gen: v7x
topology: tpu7x:2x2x1
jax: 0.10.0
libtpu: 0.0.40
codegen_flags: <defaults>
</compile_context>

<pallas_src>
import jax
import jax.numpy as jnp
from jax.experimental import pallas as pl
from jax.experimental.pallas import tpu as pltpu

# Shapes implied by the torch module (nn.Linear(2, 2), hard-coded zeros(2, 2)).
_BATCH = 2
_IN_F = 2
_OUT_F = 2


def _bias_tile_kernel(b_ref, o_ref):
    # b_ref: (1, out_f)  ->  o_ref: (batch, 3 * out_f)
    b = b_ref[...]                                   # (1, out_f)
    row = jnp.concatenate([b, b, b], axis=-1)        # (1, 3*out_f), stays in-vreg
    o_ref[...] = jnp.broadcast_to(row, o_ref.shape)  # single full-tile store


@jax.jit
def model_forward(x, weight, bias):
    """Mirrors Model.forward.

    NOTE: the torch module overwrites `x` with zeros(2, 2), so the Linear input
    is identically zero and the weight contributes nothing; the result is the
    bias broadcast over the batch, tiled 3x along the feature dim. This kernel
    bakes in that degeneracy — it is only valid for this exact module.
    """
    del x  # overwritten by torch.zeros(2, 2) in the reference module
    assert weight.shape == (_OUT_F, _IN_F), weight.shape
    assert bias.shape == (_OUT_F,), bias.shape

    bias2d = bias[None, :].astype(jnp.float32)  # fused under jit; no host dispatch

    out = pl.pallas_call(
        _bias_tile_kernel,
        out_shape=jax.ShapeDtypeStruct((_BATCH, 3 * _OUT_F), jnp.float32),
        in_specs=[pl.BlockSpec(memory_space=pltpu.MemorySpace.VMEM)],
        out_specs=pl.BlockSpec(memory_space=pltpu.MemorySpace.VMEM),
    )(bias2d)
    return out


if __name__ == "__main__":
    key = jax.random.PRNGKey(0)
    k_x, k_w, k_b = jax.random.split(key, 3)

    # Example input (ignored by the forward pass, just like the torch module).
    x = jax.random.normal(k_x, (_BATCH, _IN_F), dtype=jnp.float32)

    # Deterministic nn.Linear(2, 2)-style init: U(-1/sqrt(in), 1/sqrt(in)).
    bound = 1.0 / jnp.sqrt(float(_IN_F))
    weight = jax.random.uniform(k_w, (_OUT_F, _IN_F), jnp.float32, -bound, bound)
    bias = jax.random.uniform(k_b, (_OUT_F,), jnp.float32, -bound, bound)

    out = model_forward(x, weight, bias)
    jax.block_until_ready(out)

    # Reference check in plain JAX (full original semantics, incl. the matmul).
    y_ref = jnp.zeros((_BATCH, _IN_F), jnp.float32) @ weight.T + bias
    ref = jnp.tile(y_ref, (1, 3))
    assert out.shape == (_BATCH, 3 * _OUT_F)
    assert jnp.allclose(out, ref, atol=1e-6)

    print("KERNEL_OK")
</pallas_src>

<mosaic_0001>
module attributes {stable_mosaic.version = 11 : i64} {
  func.func @_bias_tile_kernel(%arg0: memref<1x2xf32, #tpu.memory_space<vmem>>, %arg1: memref<2x6xf32, #tpu.memory_space<vmem>>) attributes {dimension_semantics = [], scalar_prefetch = 0 : i64, scratch_operands = 0 : i64, tpu.core_type = #tpu.core_type<tc>} {
    %c0 = arith.constant 0 : index
    %c0_0 = arith.constant 0 : index
    %0 = vector.load %arg0[%c0, %c0_0] : memref<1x2xf32, #tpu.memory_space<vmem>>, vector<1x2xf32>
    %1 = tpu.concatenate %0, %0, %0 in 1 : vector<1x2xf32>, vector<1x2xf32>, vector<1x2xf32> -> vector<1x6xf32>
    %2 = vector.shape_cast %1 : vector<1x6xf32> to vector<1x6xf32>
    %3 = vector.broadcast %2 : vector<1x6xf32> to vector<2x6xf32>
    %c0_1 = arith.constant 0 : index
    %c0_2 = arith.constant 0 : index
    %4 = vector.load %arg1[%c0_1, %c0_2] : memref<2x6xf32, #tpu.memory_space<vmem>>, vector<2x6xf32>
    tpu.vector_store %arg1[%c0_1, %c0_2], %3 {strides = array<i32>} : memref<2x6xf32, #tpu.memory_space<vmem>>, vector<2x6xf32>,
    return
  }
}

</mosaic_0001>

<llo_original>
// kernel: model_forward.1
$region0: #{model_forward.1}
  #allocation0 [shape = 'u32[]', space=smem, size = 0x4, offset = 0x4, fixed_abs, tag = 'smem constant byte address 0x4 - core index']
  #allocation1 [shape = 'u32[144,128]{1,0:T(1,128)}', space=vmem, size = 0x12000, scoped, tag = 'internal scratch']
  %s0 = inlined_call_operand.vmem [shape: f32[1,2], index: 0, kind: input, shape index: {}]
  %s1 = inlined_call_operand.hbm [shape: f32[2,6], index: 1, kind: output, shape index: {}]
  %s2 = sld [smem:[#allocation0]]
  $region14: #{model_forward.1} parent=0
    _
  %s4 = ssub.s32 1, %s2
  %s5 = scalar_select 0, %s4, %s2
  $region1: #{model_forward.1} parent=0
    #allocation2 [shape = 'u8[1024]{0}', space=vmem, size = 0x400, scoped, tag = 'output window, operand 0, single buffered']
    #allocation3 [shape = 's32[1]{0}', space=sflag, size = 0x4, scoped, tag = 'scoped memory for model_forward.1']
    %6 = vsyncpa [#allocation3], 0
    // Predicated region
    $region2: #{model_forward.1} parent=1 // pred_check
      _
    $region3: #{model_forward.1} parent=1 // pred_check_branch
      %8 = sbr.rel (0) target = $region5
    $region4: #{model_forward.1} parent=1 // pred_region
      _
    $region5: #{model_forward.1} parent=1 // pred_fallthru
      _
    %v9 = vld [vmem:[%s0] sm:$0x1]
    %v11 = vlaneseq
    %v12 = vshrl.u32 %v11, 7
    %v13 = vsub.s32 0, %v12
    %v14 = vrot.slane %v9, %v13
    %15 = vrot.lane.b32.xlu0 %v14, 2
    %v16 = vpop.permute.xlu0 %15
    %18 = vrot.lane.b32.xlu0 %v14, 4
    %v19 = vpop.permute.xlu0 %18
    %vm21 = vcmask 15360
    %v22 = vsel %vm21, %v9, %v16
    %vm23 = vcmask 31744
    %v24 = vsel %vm23, %v22, %v19
    %v25 = vlaneseq
    %v26 = vshrl.u32 %v25, 7
    %v27 = vsub.s32 0, %v26
    %v28 = vrot.slane %v24, %v27
    %vm29 = vcmask 41984
    %30 = vst.msk [vmem:[#allocation2] sm:$0x3] %vm29, %v28
    // Predicated region
    $region6: #{model_forward.1} parent=1 // pred_check
      _
    $region7: #{model_forward.1} parent=1 // pred_check_branch
      %32 = sbr.rel (0) target = $region9
    $region8: #{model_forward.1} parent=1 // pred_region
      %s34 = ssub.s32 32, 32
      %35 = vsyncadd [#allocation3], %s34
      %s37 = sshll.u32 [#allocation2], 4
      %s38 = int_to_ptr.vmem [resolvable:$true] %s37
      %40 = dma.vmem_to_hbm [thread:$0]  %s38, 32, %s1, [#allocation3]
    $region9: #{model_forward.1} parent=1 // pred_fallthru
      _
    // Predicated region
    $region10: #{model_forward.1} parent=1 // pred_check
      _
    $region11: #{model_forward.1} parent=1 // pred_check_branch
      %42 = sbr.rel (0) target = $region13
    $region12: #{model_forward.1} parent=1 // pred_region
      %43 = dma.done [#allocation3], 32
    $region13: #{model_forward.1} parent=1 // pred_fallthru
      _
    %44 = vsyncpa [#allocation3], 1

</llo_original>
